<compile_context>
chip_gen: v7x
topology: tpu7x:2x2x1
jax: 0.10.0
libtpu: 0.0.40
codegen_flags: <defaults>
</compile_context>

<pallas_src>
import jax
import jax.numpy as jnp
from jax.experimental import pallas as pl
from jax.experimental.pallas import tpu as pltpu


# ----------------------------- kernels ---------------------------------------

def _exchange_rows_kernel(keep_ref, x0_ref, x1_ref, o1_ref, o2_ref):
    """Per-row (= per batch*channel) select. keep_ref: (TR, 2) int32 flags."""
    keep = keep_ref[...]
    keep1 = keep[:, 0:1] > 0            # (TR, 1) -> broadcasts over the lane axis
    keep2 = keep[:, 1:2] > 0
    a = x0_ref[...]                     # (TR, HW)
    b = x1_ref[...]
    o1_ref[...] = jnp.where(keep1, a, b)
    o2_ref[...] = jnp.where(keep2, b, a)


def _exchange_flat_kernel(code_ref, x0_ref, x1_ref, o1_ref, o2_ref):
    """Per-element select for the flat (R, 128) layout.

    code bit0 -> keep x0 for y1; bit1 -> keep x1 for y2.
    """
    c = code_ref[...].astype(jnp.int32)  # (TR, 128) uint8 -> int32
    keep1 = (c & 1) != 0
    keep2 = (c & 2) != 0
    a = x0_ref[...]
    b = x1_ref[...]
    o1_ref[...] = jnp.where(keep1, a, b)
    o2_ref[...] = jnp.where(keep2, b, a)


# ----------------------------- tiling helper ---------------------------------

def _pick_row_tile(n_rows, row_bytes, target_block_bytes, align):
    """Largest row tile (multiple of `align`) whose block is ~target_block_bytes.

    Prefers a divisor of n_rows (no ragged edge); otherwise returns an aligned tile
    and lets Pallas mask the ragged last block.
    """
    ideal = max(1, target_block_bytes // max(1, row_bytes))
    if ideal >= n_rows or n_rows <= align:
        return n_rows                                  # single full-extent block
    ideal = max(align, (ideal // align) * align)
    ideal = min(ideal, (n_rows // align) * align)
    for tr in range(ideal, align - 1, -align):         # prefer exact divisor
        if n_rows % tr == 0:
            return tr
    return ideal                                       # ragged last block (masked)


# ----------------------------- wrapper ----------------------------------------

def exchange_forward(x0, x1, bn1_weight, bn2_weight, bn_threshold, *,
                     target_block_bytes=2 * 1024 * 1024,
                     vmem_limit_bytes=48 * 1024 * 1024):
    """Exchange.forward([x0, x1], [bn0, bn1], t) -> [y1, y2].

    x0, x1: (B, C, H, W); bn*_weight: (C,); bn_threshold: python float / 0-d scalar.
    """
    assert x0.shape == x1.shape and x0.ndim == 4
    B, C, H, W = x0.shape
    HW = H * W
    N = B * C
    total = N * HW
    dtype = x0.dtype
    itemsize = jnp.dtype(dtype).itemsize

    # Channel keep flags, compared in the BN weights' own dtype (matches PyTorch).
    keep1_c = jnp.abs(bn1_weight) >= jnp.asarray(bn_threshold, bn1_weight.dtype)
    keep2_c = jnp.abs(bn2_weight) >= jnp.asarray(bn_threshold, bn2_weight.dtype)

    compiler_params = pltpu.CompilerParams(
        # Independent row tiles -> megacore sharding where available.
        # TODO(synk): on v7x verify both TensorCores get tiles; if "parallel" does not
        # split the grid there, switch this axis to pltpu.CORE_PARALLEL (kept as
        # "parallel" here for portability to single-TC v5e/v6e).
        dimension_semantics=("parallel",),
        vmem_limit_bytes=vmem_limit_bytes,
    )

    # Layout choice: per-row (N, HW) slab when HW is lane-dense (or when we cannot
    # repack at all); otherwise a flat lane-dense (total/128, 128) slab with a
    # per-element uint8 select code.
    use_row_layout = (HW % 128 == 0) or (total % 128 != 0)

    if use_row_layout:
        x0f = x0.reshape(N, HW)
        x1f = x1.reshape(N, HW)
        keep = jnp.stack(
            [jnp.tile(keep1_c, B), jnp.tile(keep2_c, B)], axis=1
        ).astype(jnp.int32)                                         # (N, 2)

        TR = _pick_row_tile(N, HW * itemsize, target_block_bytes, align=8)
        grid = (pl.cdiv(N, TR),)
        row_spec = pl.BlockSpec((TR, HW), lambda i: (i, 0))
        keep_spec = pl.BlockSpec((TR, 2), lambda i: (i, 0))

        cost = pl.CostEstimate(flops=0, transcendentals=0,
                               bytes_accessed=4 * total * itemsize + N * 2 * 4)

        y1f, y2f = pl.pallas_call(
            _exchange_rows_kernel,
            out_shape=(jax.ShapeDtypeStruct((N, HW), dtype),
                       jax.ShapeDtypeStruct((N, HW), dtype)),
            grid_spec=pl.GridSpec(
                grid=grid,
                in_specs=[keep_spec, row_spec, row_spec],
                out_specs=(row_spec, row_spec),
            ),
            compiler_params=compiler_params,
            cost_estimate=cost,
        )(keep, x0f, x1f)
    else:
        # HW not a multiple of 128 but total is: flatten everything to a lane-dense
        # (R, 128) slab; route per element with a uint8 code.
        R = total // 128
        x0f = x0.reshape(R, 128)
        x1f = x1.reshape(R, 128)
        code_c = (keep1_c.astype(jnp.uint8)
                  + jnp.uint8(2) * keep2_c.astype(jnp.uint8))        # (C,)
        code = jnp.broadcast_to(code_c[None, :, None], (B, C, HW)).reshape(R, 128)

        TR = _pick_row_tile(R, 128 * itemsize, target_block_bytes, align=32)
        grid = (pl.cdiv(R, TR),)
        row_spec = pl.BlockSpec((TR, 128), lambda i: (i, 0))
        code_spec = pl.BlockSpec((TR, 128), lambda i: (i, 0))

        cost = pl.CostEstimate(flops=0, transcendentals=0,
                               bytes_accessed=4 * total * itemsize + total)

        y1f, y2f = pl.pallas_call(
            _exchange_flat_kernel,
            out_shape=(jax.ShapeDtypeStruct((R, 128), dtype),
                       jax.ShapeDtypeStruct((R, 128), dtype)),
            grid_spec=pl.GridSpec(
                grid=grid,
                in_specs=[code_spec, row_spec, row_spec],
                out_specs=(row_spec, row_spec),
            ),
            compiler_params=compiler_params,
            cost_estimate=cost,
        )(code, x0f, x1f)

    y1 = y1f.reshape(B, C, H, W)
    y2 = y2f.reshape(B, C, H, W)
    return [y1, y2]


# ----------------------------- self-test --------------------------------------

if __name__ == "__main__":
    key = jax.random.PRNGKey(0)

    def reference(x0, x1, w1, w2, t):
        m1 = (jnp.abs(w1) >= t)[None, :, None, None]
        m2 = (jnp.abs(w2) >= t)[None, :, None, None]
        return jnp.where(m1, x0, x1), jnp.where(m2, x1, x0)

    def run_case(k, B, C, H, W, t, **kw):
        k0, k1, k2, k3 = jax.random.split(k, 4)
        x0 = jax.random.normal(k0, (B, C, H, W), jnp.float32)
        x1 = jax.random.normal(k1, (B, C, H, W), jnp.float32)
        w1 = jax.random.normal(k2, (C,), jnp.float32)   # bn[0].weight
        w2 = jax.random.normal(k3, (C,), jnp.float32)   # bn[1].weight
        y1, y2 = exchange_forward(x0, x1, w1, w2, t, **kw)
        y1 = jax.block_until_ready(y1)
        y2 = jax.block_until_ready(y2)
        r1, r2 = reference(x0, x1, w1, w2, t)
        assert y1.shape == x0.shape and y2.shape == x0.shape
        assert bool(jnp.array_equal(y1, r1)) and bool(jnp.array_equal(y2, r2))

    ks = jax.random.split(key, 3)
    # 1) Lane-dense per-row path (HW % 128 == 0), single row tile.
    run_case(ks[0], 2, 16, 16, 16, 0.5)
    # 2) Per-row path with a multi-tile grid and a ragged last tile (N=12, TR=8).
    run_case(ks[1], 3, 4, 16, 16, 0.5, target_block_bytes=8 * 1024)
    # 3) Flat (R, 128) path: HW = 64 is not a multiple of 128.
    run_case(ks[2], 2, 8, 8, 8, 0.3)

    print("KERNEL_OK")
</pallas_src>

<mosaic_0001>
module attributes {stable_mosaic.version = 11 : i64} {
  func.func @_exchange_rows_kernel(%arg0: i32, %arg1: memref<32x2xi32, #tpu.memory_space<vmem>>, %arg2: memref<32x256xf32, #tpu.memory_space<vmem>>, %arg3: memref<32x256xf32, #tpu.memory_space<vmem>>, %arg4: memref<32x256xf32, #tpu.memory_space<vmem>>, %arg5: memref<32x256xf32, #tpu.memory_space<vmem>>) attributes {dimension_semantics = [#tpu.dimension_semantics<parallel>], iteration_bounds = array<i64: 1>, scalar_prefetch = 0 : i64, scratch_operands = 0 : i64, tpu.core_type = #tpu.core_type<tc>, window_params = [{transform_indices = @transform_0, window_bounds = array<i64: 32, 2>}, {transform_indices = @transform_1, window_bounds = array<i64: 32, 256>}, {transform_indices = @transform_2, window_bounds = array<i64: 32, 256>}, {transform_indices = @transform_3, window_bounds = array<i64: 32, 256>}, {transform_indices = @transform_4, window_bounds = array<i64: 32, 256>}]} {
    %c0 = arith.constant 0 : index
    %c0_0 = arith.constant 0 : index
    %0 = vector.load %arg1[%c0, %c0_0] : memref<32x2xi32, #tpu.memory_space<vmem>>, vector<32x2xi32>
    %1 = vector.extract_strided_slice %0 {offsets = [0, 0], sizes = [32, 1], strides = [1, 1]} : vector<32x2xi32> to vector<32x1xi32>
    %c0_i32 = arith.constant 0 : i32
    %2 = vector.broadcast %c0_i32 : i32 to vector<32x1xi32>
    %3 = arith.cmpi sgt, %1, %2 : vector<32x1xi32>
    %4 = vector.extract_strided_slice %0 {offsets = [0, 1], sizes = [32, 1], strides = [1, 1]} : vector<32x2xi32> to vector<32x1xi32>
    %c0_i32_1 = arith.constant 0 : i32
    %5 = vector.broadcast %c0_i32_1 : i32 to vector<32x1xi32>
    %6 = arith.cmpi sgt, %4, %5 : vector<32x1xi32>
    %c0_2 = arith.constant 0 : index
    %c0_3 = arith.constant 0 : index
    %7 = vector.load %arg2[%c0_2, %c0_3] : memref<32x256xf32, #tpu.memory_space<vmem>>, vector<32x256xf32>
    %c0_4 = arith.constant 0 : index
    %c0_5 = arith.constant 0 : index
    %8 = vector.load %arg3[%c0_4, %c0_5] : memref<32x256xf32, #tpu.memory_space<vmem>>, vector<32x256xf32>
    %9 = vector.shape_cast %3 : vector<32x1xi1> to vector<32x1xi1>
    %10 = vector.broadcast %9 : vector<32x1xi1> to vector<32x256xi1>
    %11 = arith.select %10, %7, %8 : vector<32x256xi1>, vector<32x256xf32>
    %c0_6 = arith.constant 0 : index
    %c0_7 = arith.constant 0 : index
    %12 = vector.load %arg4[%c0_6, %c0_7] : memref<32x256xf32, #tpu.memory_space<vmem>>, vector<32x256xf32>
    tpu.vector_store %arg4[%c0_6, %c0_7], %11 {strides = array<i32>} : memref<32x256xf32, #tpu.memory_space<vmem>>, vector<32x256xf32>,
    %13 = vector.shape_cast %6 : vector<32x1xi1> to vector<32x1xi1>
    %14 = vector.broadcast %13 : vector<32x1xi1> to vector<32x256xi1>
    %15 = arith.select %14, %8, %7 : vector<32x256xi1>, vector<32x256xf32>
    %c0_8 = arith.constant 0 : index
    %c0_9 = arith.constant 0 : index
    %16 = vector.load %arg5[%c0_8, %c0_9] : memref<32x256xf32, #tpu.memory_space<vmem>>, vector<32x256xf32>
    tpu.vector_store %arg5[%c0_8, %c0_9], %15 {strides = array<i32>} : memref<32x256xf32, #tpu.memory_space<vmem>>, vector<32x256xf32>,
    return
  }
  func.func @transform_0(%arg0: i32) -> (i32, i32) {
    %c0_i32 = arith.constant 0 : i32
    %c0_i32_0 = arith.constant 0 : i32
    return %arg0, %c0_i32 : i32, i32
  }
  func.func @transform_1(%arg0: i32) -> (i32, i32) {
    %c0_i32 = arith.constant 0 : i32
    %c0_i32_0 = arith.constant 0 : i32
    return %arg0, %c0_i32 : i32, i32
  }
  func.func @transform_2(%arg0: i32) -> (i32, i32) {
    %c0_i32 = arith.constant 0 : i32
    %c0_i32_0 = arith.constant 0 : i32
    return %arg0, %c0_i32 : i32, i32
  }
  func.func @transform_3(%arg0: i32) -> (i32, i32) {
    %c0_i32 = arith.constant 0 : i32
    %c0_i32_0 = arith.constant 0 : i32
    return %arg0, %c0_i32 : i32, i32
  }
  func.func @transform_4(%arg0: i32) -> (i32, i32) {
    %c0_i32 = arith.constant 0 : i32
    %c0_i32_0 = arith.constant 0 : i32
    return %arg0, %c0_i32 : i32, i32
  }
}

</mosaic_0001>

<llo_original>
// kernel: tpu_custom_call.1
$region0: #{tpu_custom_call.1}
  #allocation0 [shape = 'u32[]', space=smem, size = 0x4, offset = 0x4, fixed_abs, tag = 'smem constant byte address 0x4 - core index']
  #allocation1 [shape = 'u32[144,128]{1,0:T(1,128)}', space=vmem, size = 0x12000, scoped, tag = 'internal scratch']
  %s0 = inlined_call_operand.vmem [shape: s32[32,2], index: 0, kind: input, shape index: {}]
  %s1 = inlined_call_operand.hbm [shape: f32[32,256], index: 1, kind: input, shape index: {}]
  %s2 = inlined_call_operand.hbm [shape: f32[32,256], index: 2, kind: input, shape index: {}]
  %s3 = inlined_call_operand.hbm [shape: f32[32,256], index: 3, kind: output, shape index: {0}]
  %s4 = inlined_call_operand.hbm [shape: f32[32,256], index: 4, kind: output, shape index: {1}]
  %5 = xla_tuple %s3, %s4
  %s6 = sld [smem:[#allocation0]]
  $region38: #{tpu_custom_call.1} parent=0
    _
  %s8 = ssub.s32 1, %s6
  %s9 = scalar_select 0, %s8, %s6
  $region1: #{tpu_custom_call.1} parent=0
    #allocation2 [shape = 'u8[32768]{0}', space=vmem, size = 0x8000, scoped, tag = 'input window, operand 1, single buffered']
    #allocation3 [shape = 's32[1]{0}', space=sflag, size = 0x4, scoped, tag = 'scoped memory for tpu_custom_call.1']
    #allocation4 [shape = 's32[1]{0}', space=sflag, size = 0x4, scoped, tag = 'scoped memory for tpu_custom_call.1']
    #allocation5 [shape = 'u8[32768]{0}', space=vmem, size = 0x8000, scoped, tag = 'input window, operand 2, single buffered']
    #allocation6 [shape = 's32[1]{0}', space=sflag, size = 0x4, scoped, tag = 'scoped memory for tpu_custom_call.1']
    #allocation7 [shape = 'u8[32768]{0}', space=vmem, size = 0x8000, scoped, tag = 'output window, operand 0, single buffered']
    #allocation8 [shape = 'u8[32768]{0}', space=vmem, size = 0x8000, scoped, tag = 'output window, operand 1, single buffered']
    #allocation9 [shape = 's32[1]{0}', space=sflag, size = 0x4, scoped, tag = 'scoped memory for tpu_custom_call.1']
    %10 = vsyncpa [#allocation3], 0
    %11 = vsyncpa [#allocation6], 0
    %12 = vsyncpa [#allocation4], 0
    %13 = vsyncpa [#allocation9], 0
    // Predicated region
    $region2: #{tpu_custom_call.1} parent=1 // pred_check
      _
    $region3: #{tpu_custom_call.1} parent=1 // pred_check_branch
      %15 = sbr.rel (0) target = $region5
    $region4: #{tpu_custom_call.1} parent=1 // pred_region
      _
    $region5: #{tpu_custom_call.1} parent=1 // pred_fallthru
      _
    // Predicated region
    $region6: #{tpu_custom_call.1} parent=1 // pred_check
      _
    $region7: #{tpu_custom_call.1} parent=1 // pred_check_branch
      %17 = sbr.rel (0) target = $region9
    $region8: #{tpu_custom_call.1} parent=1 // pred_region
      %s19 = ssub.s32 1024, 1024
      %20 = vsyncadd [#allocation3], %s19
      %s21 = sshll.u32 [#allocation2], 4
      %s22 = int_to_ptr.vmem [resolvable:$true] %s21
      %27 = dma.hbm_to_vmem [thread:$0]  %s1, 1024, %s22, [#allocation3], 256, 256, 16
    $region9: #{tpu_custom_call.1} parent=1 // pred_fallthru
      _
    // Predicated region
    $region10: #{tpu_custom_call.1} parent=1 // pred_check
      _
    $region11: #{tpu_custom_call.1} parent=1 // pred_check_branch
      %29 = sbr.rel (0) target = $region13
    $region12: #{tpu_custom_call.1} parent=1 // pred_region
      %s31 = ssub.s32 1024, 1024
      %32 = vsyncadd [#allocation6], %s31
      %s33 = sshll.u32 [#allocation5], 4
      %s34 = int_to_ptr.vmem [resolvable:$true] %s33
      %39 = dma.hbm_to_vmem [thread:$0]  %s2, 1024, %s34, [#allocation6], 256, 256, 16
    $region13: #{tpu_custom_call.1} parent=1 // pred_fallthru
      _
    // Predicated region
    $region14: #{tpu_custom_call.1} parent=1 // pred_check
      _
    $region15: #{tpu_custom_call.1} parent=1 // pred_check_branch
      %41 = sbr.rel (0) target = $region17
    $region16: #{tpu_custom_call.1} parent=1 // pred_region
      %42 = dma.done [#allocation3], 1024
    $region17: #{tpu_custom_call.1} parent=1 // pred_fallthru
      _
    // Predicated region
    $region18: #{tpu_custom_call.1} parent=1 // pred_check
      _
    $region19: #{tpu_custom_call.1} parent=1 // pred_check_branch
      %44 = sbr.rel (0) target = $region21
    $region20: #{tpu_custom_call.1} parent=1 // pred_region
      %45 = dma.done [#allocation6], 1024
    $region21: #{tpu_custom_call.1} parent=1 // pred_fallthru
      _
    %v46 = vld [vmem:[%s0] sm:$0xff]
    %v47 = vld [vmem:[%s0 + $0x8] sm:$0xff]
    %v48 = vld [vmem:[%s0 + $0x10] sm:$0xff]
    %v49 = vld [vmem:[%s0 + $0x18] sm:$0xff]
    %vm50 = vcmp.gt.s32.totalorder %v46, 0
    %vm51 = vcmp.gt.s32.totalorder %v47, 0
    %vm52 = vcmp.gt.s32.totalorder %v48, 0
    %vm53 = vcmp.gt.s32.totalorder %v49, 0
    %v54 = vld [vmem:[#allocation2] sm:$0xff]
    %v55 = vld [vmem:[#allocation2 + $0x8] sm:$0xff]
    %v56 = vld [vmem:[#allocation2 + $0x10] sm:$0xff]
    %v57 = vld [vmem:[#allocation2 + $0x18] sm:$0xff]
    %v58 = vld [vmem:[#allocation2 + $0x20] sm:$0xff]
    %v59 = vld [vmem:[#allocation2 + $0x28] sm:$0xff]
    %v60 = vld [vmem:[#allocation2 + $0x30] sm:$0xff]
    %v61 = vld [vmem:[#allocation2 + $0x38] sm:$0xff]
    %v62 = vld [vmem:[#allocation5] sm:$0xff]
    %v63 = vld [vmem:[#allocation5 + $0x8] sm:$0xff]
    %v64 = vld [vmem:[#allocation5 + $0x10] sm:$0xff]
    %v65 = vld [vmem:[#allocation5 + $0x18] sm:$0xff]
    %v66 = vld [vmem:[#allocation5 + $0x20] sm:$0xff]
    %v67 = vld [vmem:[#allocation5 + $0x28] sm:$0xff]
    %v68 = vld [vmem:[#allocation5 + $0x30] sm:$0xff]
    %v69 = vld [vmem:[#allocation5 + $0x38] sm:$0xff]
    %v70 = vsel %vm50, 1, 0
    %v71 = vsel %vm51, 1, 0
    %v72 = vsel %vm52, 1, 0
    %v73 = vsel %vm53, 1, 0
    %74 = vset.pattern.permute.xlu0 0
    %75 = vperm.xlu0 %74, %v70
    %v76 = vpop.permute.xlu0 %75
    %77 = vset.pattern.permute.xlu0 0
    %78 = vperm.xlu0 %77, %v71
    %v79 = vpop.permute.xlu0 %78
    %80 = vset.pattern.permute.xlu0 0
    %81 = vperm.xlu0 %80, %v72
    %v82 = vpop.permute.xlu0 %81
    %83 = vset.pattern.permute.xlu0 0
    %84 = vperm.xlu0 %83, %v73
    %v85 = vpop.permute.xlu0 %84
    %vm86 = vcmp.eq.s32.totalorder %v76, 1
    %vm87 = vcmp.eq.s32.totalorder %v79, 1
    %vm88 = vcmp.eq.s32.totalorder %v82, 1
    %vm89 = vcmp.eq.s32.totalorder %v85, 1
    %v90 = vsel %vm86, %v54, %v62
    %v91 = vsel %vm86, %v55, %v63
    %v92 = vsel %vm87, %v56, %v64
    %v93 = vsel %vm87, %v57, %v65
    %v94 = vsel %vm88, %v58, %v66
    %v95 = vsel %vm88, %v59, %v67
    %v96 = vsel %vm89, %v60, %v68
    %v97 = vsel %vm89, %v61, %v69
    %98 = vst [vmem:[#allocation7] sm:$0xff] %v90
    %99 = vst [vmem:[#allocation7 + $0x8] sm:$0xff] %v91
    %100 = vst [vmem:[#allocation7 + $0x10] sm:$0xff] %v92
    %101 = vst [vmem:[#allocation7 + $0x18] sm:$0xff] %v93
    %102 = vst [vmem:[#allocation7 + $0x20] sm:$0xff] %v94
    %103 = vst [vmem:[#allocation7 + $0x28] sm:$0xff] %v95
    %104 = vst [vmem:[#allocation7 + $0x30] sm:$0xff] %v96
    %105 = vst [vmem:[#allocation7 + $0x38] sm:$0xff] %v97
    %106 = vset.pattern.permute.xlu0 1
    %107 = vperm.xlu0 %106, %v70
    %v108 = vpop.permute.xlu0 %107
    %109 = vset.pattern.permute.xlu0 1
    %110 = vperm.xlu0 %109, %v71
    %v111 = vpop.permute.xlu0 %110
    %112 = vset.pattern.permute.xlu0 1
    %113 = vperm.xlu0 %112, %v72
    %v114 = vpop.permute.xlu0 %113
    %115 = vset.pattern.permute.xlu0 1
    %116 = vperm.xlu0 %115, %v73
    %v117 = vpop.permute.xlu0 %116
    %vm118 = vcmp.eq.s32.totalorder %v108, 1
    %vm119 = vcmp.eq.s32.totalorder %v111, 1
    %vm120 = vcmp.eq.s32.totalorder %v114, 1
    %vm121 = vcmp.eq.s32.totalorder %v117, 1
    %v122 = vsel %vm118, %v62, %v54
    %v123 = vsel %vm118, %v63, %v55
    %v124 = vsel %vm119, %v64, %v56
    %v125 = vsel %vm119, %v65, %v57
    %v126 = vsel %vm120, %v66, %v58
    %v127 = vsel %vm120, %v67, %v59
    %v128 = vsel %vm121, %v68, %v60
    %v129 = vsel %vm121, %v69, %v61
    %130 = vst [vmem:[#allocation8] sm:$0xff] %v122
    %131 = vst [vmem:[#allocation8 + $0x8] sm:$0xff] %v123
    %132 = vst [vmem:[#allocation8 + $0x10] sm:$0xff] %v124
    %133 = vst [vmem:[#allocation8 + $0x18] sm:$0xff] %v125
    %134 = vst [vmem:[#allocation8 + $0x20] sm:$0xff] %v126
    %135 = vst [vmem:[#allocation8 + $0x28] sm:$0xff] %v127
    %136 = vst [vmem:[#allocation8 + $0x30] sm:$0xff] %v128
    %137 = vst [vmem:[#allocation8 + $0x38] sm:$0xff] %v129
    // Predicated region
    $region22: #{tpu_custom_call.1} parent=1 // pred_check
      _
    $region23: #{tpu_custom_call.1} parent=1 // pred_check_branch
      %139 = sbr.rel (0) target = $region25
    $region24: #{tpu_custom_call.1} parent=1 // pred_region
      %s141 = ssub.s32 1024, 1024
      %142 = vsyncadd [#allocation4], %s141
      %s143 = sshll.u32 [#allocation7], 4
      %s144 = int_to_ptr.vmem [resolvable:$true] %s143
      %149 = dma.vmem_to_hbm [thread:$0]  %s144, 1024, %s3, [#allocation4], 256, 256, 16
    $region25: #{tpu_custom_call.1} parent=1 // pred_fallthru
      _
    // Predicated region
    $region26: #{tpu_custom_call.1} parent=1 // pred_check
      _
    $region27: #{tpu_custom_call.1} parent=1 // pred_check_branch
      %151 = sbr.rel (0) target = $region29
    $region28: #{tpu_custom_call.1} parent=1 // pred_region
      %s153 = ssub.s32 1024, 1024
      %154 = vsyncadd [#allocation9], %s153
      %s155 = sshll.u32 [#allocation8], 4
      %s156 = int_to_ptr.vmem [resolvable:$true] %s155
      %161 = dma.vmem_to_hbm [thread:$0]  %s156, 1024, %s4, [#allocation9], 256, 256, 16
    $region29: #{tpu_custom_call.1} parent=1 // pred_fallthru
      _
    // Predicated region
    $region30: #{tpu_custom_call.1} parent=1 // pred_check
      _
    $region31: #{tpu_custom_call.1} parent=1 // pred_check_branch
      %163 = sbr.rel (0) target = $region33
    $region32: #{tpu_custom_call.1} parent=1 // pred_region
      %164 = dma.done [#allocation4], 1024
    $region33: #{tpu_custom_call.1} parent=1 // pred_fallthru
      _
    // Predicated region
    $region34: #{tpu_custom_call.1} parent=1 // pred_check
      _
    $region35: #{tpu_custom_call.1} parent=1 // pred_check_branch
      %166 = sbr.rel (0) target = $region37
    $region36: #{tpu_custom_call.1} parent=1 // pred_region
      %167 = dma.done [#allocation9], 1024
    $region37: #{tpu_custom_call.1} parent=1 // pred_fallthru
      _
    %168 = vsyncpa [#allocation3], 1
    %169 = vsyncpa [#allocation6], 1
    %170 = vsyncpa [#allocation4], 1
    %171 = vsyncpa [#allocation9], 1

</llo_original>
